<compile_context>
chip_gen: v7x
topology: tpu7x:2x2x1
jax: 0.10.0
libtpu: 0.0.40
codegen_flags: <defaults>
</compile_context>

<pallas_src>
import math
from functools import partial

import jax
import jax.numpy as jnp
from jax.experimental import pallas as pl
from jax.experimental.pallas import tpu as pltpu


def _embedding_gather_kernel(ids_ref, table_hbm, pe_ref, out_ref, row_buf, sem,
                             *, scale, tile, vocab_size):
    """One grid step = one (batch row, token tile) of `tile` tokens.

    ids_ref  : (B, S)    int32, SMEM (scalar prefetch)
    table_hbm: (V, D)    HBM ref (memory_space=pl.ANY, no auto-DMA)
    pe_ref   : (tile, D) VMEM, positional encodings for this token tile
    out_ref  : (tile, D) VMEM output block (batch dim squeezed)
    row_buf  : (tile, D) VMEM scratch, gather destination
    sem      : DMA semaphore shared by all row copies of this step
    """
    b = pl.program_id(0)
    s0 = pl.program_id(1) * tile

    # Issue all row-gather DMAs for this tile; they run concurrently.
    def _issue(i, carry):
        tok = ids_ref[b, s0 + i]
        # Clamp out-of-range ids instead of reading an arbitrary row.
        tok = jnp.minimum(jnp.maximum(tok, 0), vocab_size - 1)
        pltpu.make_async_copy(
            table_hbm.at[pl.ds(tok, 1), :],   # (1, D) HBM row
            row_buf.at[pl.ds(i, 1), :],       # (1, D) VMEM row
            sem,
        ).start()
        return carry

    jax.lax.fori_loop(0, tile, _issue, 0)

    # Wait for all of them.  Every copy has the identical (1, D) size, so the
    # shared semaphore is decremented by the same amount per wait.
    def _wait(i, carry):
        pltpu.make_async_copy(
            table_hbm.at[pl.ds(0, 1), :],
            row_buf.at[pl.ds(0, 1), :],
            sem,
        ).wait()
        return carry

    jax.lax.fori_loop(0, tile, _wait, 0)

    # Pure VPU epilogue: scale + add positional encoding, full-width store.
    e = row_buf[...].astype(jnp.float32) * scale + pe_ref[...].astype(jnp.float32)
    out_ref[...] = e.astype(out_ref.dtype)


def _pick_token_tile(seq_len):
    """Largest token tile in {512, 256, 128} dividing S, else the full sequence."""
    for t in (512, 256, 128):
        if seq_len % t == 0:
            return t
    return seq_len


def embedding_layer(ids, table, pe, d_model):
    """Pallas equivalent of EmbeddingLayer.forward (eval mode)."""
    B, S = ids.shape
    V, D = table.shape
    assert D == d_model
    assert pe.shape[1] == D
    assert S <= pe.shape[0], "sequence length exceeds positional-encoding table"

    T = _pick_token_tile(S)
    assert T % 8 == 0, "token tile must be a multiple of 8 (sublane granularity)"
    num_s_tiles = S // T

    ids = ids.astype(jnp.int32)
    scale = float(math.sqrt(float(d_model)))
    kernel = partial(_embedding_gather_kernel, scale=scale, tile=T, vocab_size=V)

    return pl.pallas_call(
        kernel,
        out_shape=jax.ShapeDtypeStruct((B, S, D), table.dtype),
        grid_spec=pltpu.PrefetchScalarGridSpec(
            num_scalar_prefetch=1,                  # ids -> SMEM, available in index_maps & body
            grid=(B, num_s_tiles),
            in_specs=[
                # Embedding table stays in HBM; rows are DMA-gathered in-kernel.
                pl.BlockSpec(memory_space=pl.ANY),
                # Positional encodings for this token tile (auto-pipelined).
                pl.BlockSpec((T, D), lambda b, s, ids: (s, 0)),
            ],
            out_specs=pl.BlockSpec((pl.Squeezed(), T, D), lambda b, s, ids: (b, s, 0)),
            scratch_shapes=[
                pltpu.VMEM((T, D), table.dtype),    # gather destination
                pltpu.SemaphoreType.DMA,            # shared row-DMA semaphore
            ],
        ),
        compiler_params=pltpu.CompilerParams(
            dimension_semantics=("parallel", "parallel"),
        ),
    )(ids, table, pe)


def build_positional_encoding(d_model, max_len=5000, dtype=jnp.float32):
    """Same construction as PositionalEncoding.__init__ (host-side glue)."""
    position = jnp.arange(0.0, max_len, dtype=jnp.float32)[:, None]        # [L, 1]
    div_term = jnp.exp(
        jnp.arange(0.0, d_model, 2.0, dtype=jnp.float32)
        * -(math.log(10000.0) / d_model)
    )                                                                       # [D/2]
    pe = jnp.zeros((max_len, d_model), dtype=jnp.float32)
    pe = pe.at[:, 0::2].set(jnp.sin(position * div_term))
    pe = pe.at[:, 1::2].set(jnp.cos(position * div_term))
    return pe.astype(dtype)


if __name__ == "__main__":
    B, S = 2, 128
    d_model = 128
    vocab_size = 1000
    max_len = 512  # plenty for S=128; PyTorch default is 5000

    key = jax.random.PRNGKey(0)
    k_ids, k_tbl = jax.random.split(key)

    ids = jax.random.randint(k_ids, (B, S), 0, vocab_size, dtype=jnp.int32)
    # nn.Embedding default init: N(0, 1)
    table = jax.random.normal(k_tbl, (vocab_size, d_model), dtype=jnp.float32)
    pe = build_positional_encoding(d_model, max_len=max_len)

    out = embedding_layer(ids, table, pe, d_model)
    out = jax.block_until_ready(out)

    # Pure-JAX reference (eval-mode dropout = identity)
    ref = table[ids] * math.sqrt(d_model) + pe[None, :S, :]
    assert out.shape == (B, S, d_model)
    assert jnp.allclose(out, ref, atol=1e-5, rtol=1e-5)

    print("KERNEL_OK")
</pallas_src>

<mosaic_0001>
module attributes {stable_mosaic.version = 11 : i64} {
  func.func @_embedding_gather_kernel(%arg0: i32, %arg1: i32, %arg2: memref<2x128xi32, #tpu.memory_space<smem>>, %arg3: memref<1000x128xf32, #tpu.memory_space<any>>, %arg4: memref<128x128xf32, #tpu.memory_space<vmem>>, %arg5: memref<1x128x128xf32, #tpu.memory_space<vmem>>, %arg6: memref<128x128xf32, #tpu.memory_space<vmem>>, %arg7: memref<!tpu.dma_semaphore, #tpu.memory_space<semaphore_mem>>) attributes {dimension_semantics = [#tpu.dimension_semantics<parallel>, #tpu.dimension_semantics<parallel>], iteration_bounds = array<i64: 2, 1>, scalar_prefetch = 1 : i64, scratch_operands = 2 : i64, tpu.core_type = #tpu.core_type<tc>, window_params = [{}, {transform_indices = @transform_1, window_bounds = array<i64: 128, 128>}, {transform_indices = @transform_2, window_bounds = array<i64: 1, 128, 128>}]} {
    %c128_i32 = arith.constant 128 : i32
    %0 = arith.muli %arg1, %c128_i32 : i32
    %c0_i32 = arith.constant 0 : i32
    %c128_i32_0 = arith.constant 128 : i32
    %1 = arith.addi %c0_i32, %c128_i32_0 : i32
    %c1_i32 = arith.constant 1 : i32
    scf.for %arg8 = %c0_i32 to %1 step %c1_i32  : i32 {
      %11 = arith.addi %0, %arg8 : i32
      %12 = arith.index_cast %arg0 : i32 to index
      %13 = arith.index_cast %11 : i32 to index
      %14 = memref.load %arg2[%12, %13] : memref<2x128xi32, #tpu.memory_space<smem>>
      %c0_i32_11 = arith.constant 0 : i32
      %15 = arith.maxsi %14, %c0_i32_11 : i32
      %c999_i32 = arith.constant 999 : i32
      %16 = arith.minsi %15, %c999_i32 : i32
      %c0_i32_12 = arith.constant 0 : i32
      %17 = tpu.memref_slice %arg3[%16, %c0_i32_12] : memref<1000x128xf32, #tpu.memory_space<any>> -> memref<1x128xf32, #tpu.memory_space<any>>
      %c0_i32_13 = arith.constant 0 : i32
      %18 = tpu.memref_slice %arg6[%arg8, %c0_i32_13] : memref<128x128xf32, #tpu.memory_space<vmem>> -> memref<1x128xf32, #tpu.memory_space<vmem>>
      tpu.enqueue_dma source(%17 : memref<1x128xf32, #tpu.memory_space<any>>) target(%18 : memref<1x128xf32, #tpu.memory_space<vmem>>) target_semaphore(%arg7 : memref<!tpu.dma_semaphore, #tpu.memory_space<semaphore_mem>>)
    }
    %c128_i32_1 = arith.constant 128 : i32
    %c0_i32_2 = arith.constant 0 : i32
    %c128_i32_3 = arith.constant 128 : i32
    %2 = arith.addi %c0_i32_2, %c128_i32_3 : i32
    %c1_i32_4 = arith.constant 1 : i32
    scf.for %arg8 = %c0_i32_2 to %2 step %c1_i32_4  : i32 {
      %c0_i32_11 = arith.constant 0 : i32
      %c0_i32_12 = arith.constant 0 : i32
      %11 = tpu.memref_slice %arg3[%c0_i32_11, %c0_i32_12] : memref<1000x128xf32, #tpu.memory_space<any>> -> memref<1x128xf32, #tpu.memory_space<any>>
      %c0_i32_13 = arith.constant 0 : i32
      %c0_i32_14 = arith.constant 0 : i32
      %12 = tpu.memref_slice %arg6[%c0_i32_13, %c0_i32_14] : memref<128x128xf32, #tpu.memory_space<vmem>> -> memref<1x128xf32, #tpu.memory_space<vmem>>
      tpu.wait_dma2 semaphore(%arg7 : memref<!tpu.dma_semaphore, #tpu.memory_space<semaphore_mem>>) src(%11 : memref<1x128xf32, #tpu.memory_space<any>>) dst(%12 : memref<1x128xf32, #tpu.memory_space<vmem>>)
    }
    %c0 = arith.constant 0 : index
    %c0_5 = arith.constant 0 : index
    %3 = vector.load %arg6[%c0, %c0_5] : memref<128x128xf32, #tpu.memory_space<vmem>>, vector<128x128xf32>
    %cst = arith.constant 11.3137083 : f32
    %4 = vector.broadcast %cst : f32 to vector<128x128xf32>
    %5 = arith.mulf %3, %4 : vector<128x128xf32>
    %c0_6 = arith.constant 0 : index
    %c0_7 = arith.constant 0 : index
    %6 = vector.load %arg4[%c0_6, %c0_7] : memref<128x128xf32, #tpu.memory_space<vmem>>, vector<128x128xf32>
    %7 = arith.addf %5, %6 : vector<128x128xf32>
    %c0_8 = arith.constant 0 : index
    %c0_9 = arith.constant 0 : index
    %c0_10 = arith.constant 0 : index
    %8 = vector.load %arg5[%c0_8, %c0_9, %c0_10] : memref<1x128x128xf32, #tpu.memory_space<vmem>>, vector<1x128x128xf32>
    %9 = vector.shape_cast %8 : vector<1x128x128xf32> to vector<128x128xf32>
    %10 = vector.shape_cast %7 : vector<128x128xf32> to vector<1x128x128xf32>
    tpu.vector_store %arg5[%c0_8, %c0_9, %c0_10], %10 {strides = array<i32>} : memref<1x128x128xf32, #tpu.memory_space<vmem>>, vector<1x128x128xf32>,
    return
  }
  func.func @transform_1(%arg0: i32, %arg1: i32, %arg2: memref<2x128xi32, #tpu.memory_space<smem>>) -> (i32, i32) {
    %c0_i32 = arith.constant 0 : i32
    %c0_i32_0 = arith.constant 0 : i32
    return %arg1, %c0_i32 : i32, i32
  }
  func.func @transform_2(%arg0: i32, %arg1: i32, %arg2: memref<2x128xi32, #tpu.memory_space<smem>>) -> (i32, i32, i32) {
    %c0_i32 = arith.constant 0 : i32
    %c0_i32_0 = arith.constant 0 : i32
    return %arg0, %arg1, %c0_i32 : i32, i32, i32
  }
}

</mosaic_0001>

<llo_original>
// kernel: tpu_custom_call.1
$region0: #{tpu_custom_call.1}
  #allocation0 [shape = 'u32[]', space=smem, size = 0x4, offset = 0x4, fixed_abs, tag = 'smem constant byte address 0x4 - core index']
  #allocation1 [shape = 'u32[144,128]{1,0:T(1,128)}', space=vmem, size = 0x12000, scoped, tag = 'internal scratch']
  #allocation2 [shape = 'f32[128,128]{1,0:T(8,128)}', space=vmem, size = 0x10000, scoped, tag = 'scratch operand']
  #allocation3 [shape = 's32[1]{0}', space=sflag, size = 0x4, scoped, tag = 'scratch operand']
  #allocation4 [shape = 's32[1]{0}', space=sflag, size = 0x4, scoped, tag = 'scoped memory for tpu_custom_call.1']
  #allocation5 [shape = 'u8[1024]{0}', space=smem, size = 0x400, scoped, tag = 'prefetched SMEM operand 0']
  #allocation10 [shape = 's32[]', space=sflag, size = 0x4, offset = 0, fixed_abs, tag = 'sflag constant byte address 0x0 - dummy sync flag']
  #allocation11 [shape = 's32[]', space=sflag, size = 0x4, offset = 0, fixed_abs, tag = 'sflag constant byte address 0x0 - dummy sync flag']
  #allocation12 [shape = 'u32[]', space=smem, size = 0x4, offset = 0x44, fixed_abs, tag = 'smem constant byte address 0x44 - assertion arg 0']
  #allocation13 [shape = 'u32[]', space=smem, size = 0x4, offset = 0x48, fixed_abs, tag = 'smem constant byte address 0x48 - assertion arg 1']
  %s0 = inlined_call_operand.hbm [shape: s32[2,128], index: 0, kind: input, shape index: {}]
  %s1 = inlined_call_operand.hbm [shape: f32[1000,128], index: 1, kind: input, shape index: {}]
  %s2 = inlined_call_operand.hbm [shape: f32[512,128], index: 2, kind: input, shape index: {}]
  %s3 = inlined_call_operand.hbm [shape: f32[2,128,128], index: 3, kind: output, shape index: {}]
  %s4 = sld [smem:[#allocation0]]
  $region59: #{tpu_custom_call.1} parent=0
    _
  %s6 = ssub.s32 1, %s4
  %s7 = scalar_select 0, %s6, %s4
  %9 = dma.hbm_to_smem %s0, 32, [#allocation5], [#allocation4]
  %10 = dma.done [#allocation4], 32
  %11 = sfence
  $region1: #{tpu_custom_call.1} parent=0
    #allocation6 [shape = 'u8[65536]{0}', space=vmem, size = 0x10000, scoped, tag = 'input window, operand 2, single buffered']
    #allocation7 [shape = 's32[2]{0}', space=sflag, size = 0x8, scoped, tag = 'scoped memory for tpu_custom_call.1']
    #allocation8 [shape = 's32[2]{0}', space=sflag, size = 0x8, scoped, tag = 'scoped memory for tpu_custom_call.1']
    #allocation9 [shape = 'u8[131072]{0}', space=vmem, size = 0x20000, scoped, tag = 'output window, operand 0']
    %12 = vsyncpa [#allocation7], 0
    %13 = vsyncpa [#allocation8], 0
    %s14 = scalar_lea.sflag [#allocation8], 1
    %15 = vsyncpa %s14, 0
    loop: start=0, step=1, limit=4
    $region2: #{tpu_custom_call.1} parent=1 // loop_pre_header
      _
    $region3: #{tpu_custom_call.1} parent=1 // loop_header
      %s17 = sphi 0, %s21
      %p18 = scmp.ge.s32.totalorder %s17, 4
      %s24 = sphi 0, %s36
      %s25 = sphi 0, %s32
      %s26 = sphi 0, %s24
      %s27 = sphi 0, %s25
      %s28 = sphi 0, %s26
      %s29 = sphi 0, %s27
      %s39 = sphi 0, %s41
      %s42 = sphi 0, %s39
      %s43 = sphi 0, %s42
      %s59 = sphi 0, %s43
      %s67 = sphi 0, %s69
      %s70 = sphi 0, %s67
      %s71 = sphi 0, %s70
      %s87 = sphi 0, %s71
    $region4: #{tpu_custom_call.1} parent=1 // loop_header_branch
      %20 = sbr.rel (%p18) target = $region8
    $region5: #{tpu_custom_call.1} parent=1 // loop_body
      %s22 = ssub.s32 %s17, 1
      %s23 = ssub.s32 %s17, 2
      %s30 = sadd.s32 1, %s25
      %p31 = scmp.ge.s32.totalorder %s30, 1
      %s32 = scalar_select %p31, 0, %s30
      %s33 = sadd.s32 1, %s24
      %s34 = scalar_select %p31, %s33, %s24
      %p35 = scmp.ge.s32.totalorder %s34, 2
      %s36 = scalar_select %p35, 0, %s34
      %s37 = ssub.s32 %s25, %s32
      %p38 = scmp.eq.s32.totalorder %s37, 0
      %s40 = sadd.s32 %s39, 1
      %s41 = scalar_select %p38, %s39, %s40
      %p44 = pneg %p38
      %p45 = scmp.eq.s32.totalorder %s17, 1
      %p46 = por %p44, %p45
      %p47 = scmp.ne.s32.totalorder %s39, %s42
      %p48 = scmp.eq.s32.totalorder %s17, 0
      %p49 = por %p47, %p48
      %p50 = scmp.ne.s32.totalorder %s39, %s42
      %p51 = scmp.eq.s32.totalorder %s22, 1
      %p52 = por %p50, %p51
      %p53 = scmp.ne.s32.totalorder %s42, %s43
      %p54 = scmp.eq.s32.totalorder %s22, 0
      %p55 = por %p53, %p54
      %p56 = scmp.ne.s32.totalorder %s42, %s43
      %p57 = scmp.eq.s32.totalorder %s23, 1
      %p58 = por %p56, %p57
      %p60 = scmp.ne.s32.totalorder %s43, %s59
      %p61 = scmp.eq.s32.totalorder %s23, 0
      %p62 = por %p60, %p61
      %s63 = ssub.s32 %s24, %s36
      %s64 = ssub.s32 %s25, %s32
      %s65 = sor.u32 %s63, %s64
      %p66 = scmp.eq.s32.totalorder %s65, 0
      %s68 = sadd.s32 %s67, 1
      %s69 = scalar_select %p66, %s67, %s68
      %p72 = pneg %p66
      %p73 = scmp.eq.s32.totalorder %s17, 1
      %p74 = por %p72, %p73
      %p75 = scmp.ne.s32.totalorder %s67, %s70
      %p76 = scmp.eq.s32.totalorder %s17, 0
      %p77 = por %p75, %p76
      %p78 = scmp.ne.s32.totalorder %s67, %s70
      %p79 = scmp.eq.s32.totalorder %s22, 1
      %p80 = por %p78, %p79
      %p81 = scmp.ne.s32.totalorder %s70, %s71
      %p82 = scmp.eq.s32.totalorder %s22, 0
      %p83 = por %p81, %p82
      %p84 = scmp.ne.s32.totalorder %s70, %s71
      %p85 = scmp.eq.s32.totalorder %s23, 1
      %p86 = por %p84, %p85
      %p88 = scmp.ne.s32.totalorder %s71, %s87
      %p89 = scmp.eq.s32.totalorder %s23, 0
      %p90 = por %p88, %p89
      %p91 = scmp.le.s32.totalorder 1, %s17
      %p92 = scmp.lt.s32.totalorder %s17, 3
      %p93 = pnand %p91, %p92
      %p94 = pneg %p93
      // Predicated region
      $region9: #{tpu_custom_call.1} parent=5 // pred_check
        _
      $region10: #{tpu_custom_call.1} parent=5 // pred_check_branch
        %96 = sbr.rel (%p93) target = $region12
      $region11: #{tpu_custom_call.1} parent=5 // pred_region
        %s97 = ssub.s32 %s17, 1
        // Predicated region
        $region13: #{tpu_custom_call.1} parent=11 // pred_check
          %p98 = pneg %p55
        $region14: #{tpu_custom_call.1} parent=11 // pred_check_branch
          %100 = sbr.rel (%p98) target = $region16
        $region15: #{tpu_custom_call.1} parent=11 // pred_region
          %s101 = smul.u32 16, %s27
          %s103 = ssub.s32 2048, 2048
          %104 = vsyncadd [#allocation7], %s103
          %s105 = smul.addr %s101, 128
          %s106 = scalar_lea.hbm %s2, %s105
          %s107 = sshll.u32 [#allocation6], 4
          %s108 = int_to_ptr.vmem [resolvable:$true] %s107
          %113 = dma.hbm_to_vmem [thread:$0]  %s106, 2048, %s108, [#allocation7], 128, 128, 8
        $region16: #{tpu_custom_call.1} parent=11 // pred_fallthru
          _
      $region12: #{tpu_custom_call.1} parent=5 // pred_fallthru
        _
      %p114 = scmp.lt.s32.totalorder %s17, 2
      // Predicated region
      $region17: #{tpu_custom_call.1} parent=5 // pred_check
        %p115 = pneg %p114
      $region18: #{tpu_custom_call.1} parent=5 // pred_check_branch
        %117 = sbr.rel (%p115) target = $region20
      $region19: #{tpu_custom_call.1} parent=5 // pred_region
        _
      $region20: #{tpu_custom_call.1} parent=5 // pred_fallthru
        _
      %p118 = scmp.le.s32.totalorder 1, %s17
      %p119 = scmp.lt.s32.totalorder %s17, 3
      %p120 = pnand %p118, %p119
      %p121 = pneg %p120
      // Predicated region
      $region21: #{tpu_custom_call.1} parent=5 // pred_check
        _
      $region22: #{tpu_custom_call.1} parent=5 // pred_check_branch
        %123 = sbr.rel (%p120) target = $region24
      $region23: #{tpu_custom_call.1} parent=5 // pred_region
        %s124 = ssub.s32 %s17, 1
        // Predicated region
        $region25: #{tpu_custom_call.1} parent=23 // pred_check
          %p125 = pneg %p55
        $region26: #{tpu_custom_call.1} parent=23 // pred_check_branch
          %127 = sbr.rel (%p125) target = $region28
        $region27: #{tpu_custom_call.1} parent=23 // pred_region
          %128 = dma.done [#allocation7], 2048
        $region28: #{tpu_custom_call.1} parent=23 // pred_fallthru
          _
        %p129 = pneg %p55
        %p130 = pneg %p52
        %p131 = pneg %p83
        %p132 = pneg %p80
        %s133 = sand.u32 %s70, 1
        %s134 = scalar_lea.sflag [#allocation8], %s133
        %s135 = sand.u32 %s70, 1
        %s136 = smul.addr %s135, 128
        %s137 = scalar_lea.vmem [#allocation9], %s136
        %s138 = smul.u32 16, %s27
        %s139 = smul.u32 16, %s27
        %s140 = smul.u32 %s27, 128
        loop: start=0, step=1, limit=128
        $region29: #{tpu_custom_call.1} parent=23 // loop_pre_header
          _
        $region30: #{tpu_custom_call.1} parent=23 // loop_header
          %s142 = sphi 0, %s146
          %p143 = scmp.ge.s32.totalorder %s142, 128
        $region31: #{tpu_custom_call.1} parent=23 // loop_header_branch
          %145 = sbr.rel (%p143) target = $region35
        $region32: #{tpu_custom_call.1} parent=23 // loop_body
          %s147 = sadd.s32 %s140, %s142
          %s148 = sshra.s32 %s147, 7
          %s149 = sand.u32 %s147, 127
          %s150 = sadd.s32 %s148, %s26
          %s151 = smul.u32 %s150, 128
          %s152 = sshra.s32 %s147, 7
          %s153 = sand.u32 %s147, 127
          %s154 = sadd.s32 %s151, %s153
          %s155 = sld [smem:[#allocation5 + %s154]]
          %p156 = scmp.gt.s32.totalorder %s155, 0
          %s157 = scalar_select %p156, %s155, 0
          %p158 = scmp.lt.s32.totalorder %s157, 999
          %s159 = scalar_select %p158, %s157, 999
          %s160 = smul.addr %s159, 16
          %s161 = scalar_lea.hbm %s1, %s160
          %s162 = scalar_lea.vmem [#allocation2], %s142
          // Predicated region
          $region36: #{tpu_custom_call.1} parent=32 // pred_check
            _
          $region37: #{tpu_custom_call.1} parent=32 // pred_check_branch
            %164 = sbr.rel target = $region39
          $region38: #{tpu_custom_call.1} parent=32 // pred_region
            %165 = sst [smem:[#allocation12]] [#allocation11]
            %166 = sst [smem:[#allocation13]] [#allocation10]
          $region39: #{tpu_custom_call.1} parent=32 // pred_fallthru
            _
          %168 = shalt.err (0)
          %s170 = sshll.u32 %s162, 4
          %s171 = int_to_ptr.vmem [resolvable:$true] %s170
          %173 = dma.hbm_to_vmem [thread:$0]  %s161, 16, %s171, [#allocation3]
        $region33: #{tpu_custom_call.1} parent=23 // loop_footer
          %s146 = sadd.s32 1, %s142
        $region34: #{tpu_custom_call.1} parent=23 // loop_footer_branch
          %141 = sbr.rel target = $region30
        $region35: #{tpu_custom_call.1} parent=23 // loop_exit
          _
        loop: start=0, step=1, limit=128
        $region40: #{tpu_custom_call.1} parent=23 // loop_pre_header
          _
        $region41: #{tpu_custom_call.1} parent=23 // loop_header
          %s175 = sphi 0, %s179
          %p176 = scmp.ge.s32.totalorder %s175, 128
        $region42: #{tpu_custom_call.1} parent=23 // loop_header_branch
          %178 = sbr.rel (%p176) target = $region46
        $region43: #{tpu_custom_call.1} parent=23 // loop_body
          %s180 = smul.u32 1, 1
          %s181 = sshll.u32 %s180, 4
          %182 = dma.done [#allocation3], %s181
        $region44: #{tpu_custom_call.1} parent=23 // loop_footer
          %s179 = sadd.s32 1, %s175
        $region45: #{tpu_custom_call.1} parent=23 // loop_footer_branch
          %174 = sbr.rel target = $region41
        $region46: #{tpu_custom_call.1} parent=23 // loop_exit
          _
        %v183 = vld [vmem:[#allocation2] sm:$0xff]
        %v184 = vld [vmem:[#allocation2 + $0x8] sm:$0xff]
        %v185 = vld [vmem:[#allocation2 + $0x10] sm:$0xff]
        %v186 = vld [vmem:[#allocation2 + $0x18] sm:$0xff]
        %v187 = vld [vmem:[#allocation2 + $0x20] sm:$0xff]
        %v188 = vld [vmem:[#allocation2 + $0x28] sm:$0xff]
        %v189 = vld [vmem:[#allocation2 + $0x30] sm:$0xff]
        %v190 = vld [vmem:[#allocation2 + $0x38] sm:$0xff]
        %v191 = vld [vmem:[#allocation2 + $0x40] sm:$0xff]
        %v192 = vld [vmem:[#allocation2 + $0x48] sm:$0xff]
        %v193 = vld [vmem:[#allocation2 + $0x50] sm:$0xff]
        %v194 = vld [vmem:[#allocation2 + $0x58] sm:$0xff]
        %v195 = vld [vmem:[#allocation2 + $0x60] sm:$0xff]
        %v196 = vld [vmem:[#allocation2 + $0x68] sm:$0xff]
        %v197 = vld [vmem:[#allocation2 + $0x70] sm:$0xff]
        %v198 = vld [vmem:[#allocation2 + $0x78] sm:$0xff]
        %v199 = vmul.f32 %v183, 11.313708
        %v200 = vmul.f32 %v184, 11.313708
        %v201 = vmul.f32 %v185, 11.313708
        %v202 = vmul.f32 %v186, 11.313708
        %v203 = vmul.f32 %v187, 11.313708
        %v204 = vmul.f32 %v188, 11.313708
        %v205 = vmul.f32 %v189, 11.313708
        %v206 = vmul.f32 %v190, 11.313708
        %v207 = vmul.f32 %v191, 11.313708
        %v208 = vmul.f32 %v192, 11.313708
        %v209 = vmul.f32 %v193, 11.313708
        %v210 = vmul.f32 %v194, 11.313708
        %v211 = vmul.f32 %v195, 11.313708
        %v212 = vmul.f32 %v196, 11.313708
        %v213 = vmul.f32 %v197, 11.313708
        %v214 = vmul.f32 %v198, 11.313708
        %v215 = vld [vmem:[#allocation6] sm:$0xff]
        %v216 = vld [vmem:[#allocation6 + $0x8] sm:$0xff]
        %v217 = vld [vmem:[#allocation6 + $0x10] sm:$0xff]
        %v218 = vld [vmem:[#allocation6 + $0x18] sm:$0xff]
        %v219 = vld [vmem:[#allocation6 + $0x20] sm:$0xff]
        %v220 = vld [vmem:[#allocation6 + $0x28] sm:$0xff]
        %v221 = vld [vmem:[#allocation6 + $0x30] sm:$0xff]
        %v222 = vld [vmem:[#allocation6 + $0x38] sm:$0xff]
        %v223 = vld [vmem:[#allocation6 + $0x40] sm:$0xff]
        %v224 = vld [vmem:[#allocation6 + $0x48] sm:$0xff]
        %v225 = vld [vmem:[#allocation6 + $0x50] sm:$0xff]
        %v226 = vld [vmem:[#allocation6 + $0x58] sm:$0xff]
        %v227 = vld [vmem:[#allocation6 + $0x60] sm:$0xff]
        %v228 = vld [vmem:[#allocation6 + $0x68] sm:$0xff]
        %v229 = vld [vmem:[#allocation6 + $0x70] sm:$0xff]
        %v230 = vld [vmem:[#allocation6 + $0x78] sm:$0xff]
        %v231 = vadd.f32 %v199, %v215
        %v232 = vadd.f32 %v200, %v216
        %v233 = vadd.f32 %v201, %v217
        %v234 = vadd.f32 %v202, %v218
        %v235 = vadd.f32 %v203, %v219
        %v236 = vadd.f32 %v204, %v220
        %v237 = vadd.f32 %v205, %v221
        %v238 = vadd.f32 %v206, %v222
        %v239 = vadd.f32 %v207, %v223
        %v240 = vadd.f32 %v208, %v224
        %v241 = vadd.f32 %v209, %v225
        %v242 = vadd.f32 %v210, %v226
        %v243 = vadd.f32 %v211, %v227
        %v244 = vadd.f32 %v212, %v228
        %v245 = vadd.f32 %v213, %v229
        %v246 = vadd.f32 %v214, %v230
        %247 = vst [vmem:[%s137] sm:$0xff] %v231
        %248 = vst [vmem:[%s137 + $0x8] sm:$0xff] %v232
        %249 = vst [vmem:[%s137 + $0x10] sm:$0xff] %v233
        %250 = vst [vmem:[%s137 + $0x18] sm:$0xff] %v234
        %251 = vst [vmem:[%s137 + $0x20] sm:$0xff] %v235
        %252 = vst [vmem:[%s137 + $0x28] sm:$0xff] %v236
        %253 = vst [vmem:[%s137 + $0x30] sm:$0xff] %v237
        %254 = vst [vmem:[%s137 + $0x38] sm:$0xff] %v238
        %255 = vst [vmem:[%s137 + $0x40] sm:$0xff] %v239
        %256 = vst [vmem:[%s137 + $0x48] sm:$0xff] %v240
        %257 = vst [vmem:[%s137 + $0x50] sm:$0xff] %v241
        %258 = vst [vmem:[%s137 + $0x58] sm:$0xff] %v242
        %259 = vst [vmem:[%s137 + $0x60] sm:$0xff] %v243
        %260 = vst [vmem:[%s137 + $0x68] sm:$0xff] %v244
        %261 = vst [vmem:[%s137 + $0x70] sm:$0xff] %v245
        %262 = vst [vmem:[%s137 + $0x78] sm:$0xff] %v246
        %s263 = sand.u32 %s70, 1
        %s264 = scalar_lea.sflag [#allocation8], %s263
        %s265 = sand.u32 %s70, 1
        %s266 = smul.addr %s265, 128
        %s267 = scalar_lea.vmem [#allocation9], %s266
        // Predicated region
        $region47: #{tpu_custom_call.1} parent=23 // pred_check
          %p268 = pneg %p80
        $region48: #{tpu_custom_call.1} parent=23 // pred_check_branch
          %270 = sbr.rel (%p268) target = $region50
        $region49: #{tpu_custom_call.1} parent=23 // pred_region
          %s271 = smul.u32 16, %s27
          %s273 = ssub.s32 2048, 2048
          %274 = vsyncadd %s264, %s273
          %s275 = smul.addr %s26, 16
          %s276 = sadd.s32 %s271, %s275
          %s277 = smul.addr %s276, 128
          %s278 = scalar_lea.hbm %s3, %s277
          %s279 = sshll.u32 %s267, 4
          %s280 = int_to_ptr.vmem [resolvable:$true] %s279
          %285 = dma.vmem_to_hbm [thread:$0]  %s280, 2048, %s278, %s264, 128, 128, 8
        $region50: #{tpu_custom_call.1} parent=23 // pred_fallthru
          _
      $region24: #{tpu_custom_call.1} parent=5 // pred_fallthru
        _
      %p286 = scmp.le.s32.totalorder 2, %s17
      // Predicated region
      $region51: #{tpu_custom_call.1} parent=5 // pred_check
        %p287 = pneg %p286
      $region52: #{tpu_custom_call.1} parent=5 // pred_check_branch
        %289 = sbr.rel (%p287) target = $region54
      $region53: #{tpu_custom_call.1} parent=5 // pred_region
        %s290 = ssub.s32 %s17, 2
        // Predicated region
        $region55: #{tpu_custom_call.1} parent=53 // pred_check
          %p291 = pneg %p86
        $region56: #{tpu_custom_call.1} parent=53 // pred_check_branch
          %293 = sbr.rel (%p291) target = $region58
        $region57: #{tpu_custom_call.1} parent=53 // pred_region
          %s294 = sand.u32 %s71, 1
          %s295 = scalar_lea.sflag [#allocation8], %s294
          %s296 = sand.u32 %s71, 1
          %s297 = smul.addr %s296, 128
          %s298 = scalar_lea.vmem [#allocation9], %s297
          %299 = dma.done %s295, 2048
        $region58: #{tpu_custom_call.1} parent=53 // pred_fallthru
          _
      $region54: #{tpu_custom_call.1} parent=5 // pred_fallthru
        _
    $region6: #{tpu_custom_call.1} parent=1 // loop_footer
      %s21 = sadd.s32 1, %s17
    $region7: #{tpu_custom_call.1} parent=1 // loop_footer_branch
      %16 = sbr.rel target = $region3
    $region8: #{tpu_custom_call.1} parent=1 // loop_exit
      _
    %300 = vsyncpa [#allocation7], 1
    %s301 = scalar_lea.sflag [#allocation7], 1
    %302 = vsyncpa %s301, 1
    %303 = vsyncpa [#allocation8], 1
    %s304 = scalar_lea.sflag [#allocation8], 1
    %305 = vsyncpa %s304, 1
  %306 = vsyncmov [#allocation3]
  %s307 = vpop.sfrf %306
  %p308 = scmp.eq.s32.totalorder %s307, 0
  %p309 = pneg %p308
  %311 = shalt.err (%p309)

</llo_original>
